<compile_context>
chip_gen: v7x
topology: tpu7x:2x2x1
jax: 0.10.0
libtpu: 0.0.40
codegen_flags: <defaults>
</compile_context>

<pallas_src>
import functools

import jax
import jax.numpy as jnp
from jax import lax
from jax.experimental import pallas as pl
from jax.experimental.pallas import tpu as pltpu

_SUBLANE = 8
_LANE = 128
_PER_BUFFER_CAP = 2 * 1024 * 1024   # per-input VMEM tile bytes (roofline plateau)
_MAX_PACKED_WIDTH = 2048            # cap on lane-packed row width (elements)
_MAX_INNER_CHUNKS = 4               # in-kernel accumulation chunks per tile


def _ceil_div(a, b):
    return -(-a // b)


def _round_up(a, m):
    return _ceil_div(a, m) * m


def _tpu_info():
    """(tensorcore_count, vmem_capacity_bytes) with conservative fallbacks."""
    try:
        info = pltpu.get_tpu_info()
    except Exception:
        return 1, 64 * 1024 * 1024
    vmem = int(getattr(info, "vmem_capacity_bytes", 64 * 1024 * 1024) or (64 << 20))
    cores = 1
    for name in ("num_cores", "core_count", "num_tensorcores",
                 "tensorcore_count", "num_tensor_cores"):
        v = getattr(info, name, None)
        if v:
            try:
                cores = max(1, int(v))
                break
            except (TypeError, ValueError):
                pass
    return cores, vmem


def _choose_pack_factor(rows, w):
    """Pick k | rows (no padding ever) maximising lane utilisation of k*w."""
    if w >= _MAX_PACKED_WIDTH:
        return 1
    kmax = max(1, min(rows, _MAX_PACKED_WIDTH // w))
    best, best_k = None, 1
    for k in range(1, kmax + 1):
        if rows % k:
            continue
        wb = k * w
        util = wb / _round_up(wb, _LANE)
        # prefer: keeps >=8 packed rows (sublane-dense blocks), then lane util,
        # then the smaller k.
        cand = ((rows // k) >= _SUBLANE, util, -k)
        if best is None or cand > best:
            best, best_k = cand, k
    return best_k


def _temporal_loss_kernel(g_ref, c_ref, m_ref, o_ref, acc_ref, *,
                          inv_count, super_rows, steps, rows_tile,
                          chunk_rows, num_chunks, last_block, needs_mask):
    """Grid = (P, steps). Blocks are (rows_tile, Wb); acc is (8, Wb) f32."""
    step = pl.program_id(1)

    @pl.when(step == 0)
    def _init():
        acc_ref[...] = jnp.zeros_like(acc_ref)

    if needs_mask:
        # Row offset of this tile in the packed (super_rows, Wb) view.  The
        # index_map clamps to the last in-bounds block; recompute identically.
        p = pl.program_id(0)
        block = jnp.minimum(p * steps + step, last_block)
        limit = super_rows - block * rows_tile          # valid rows in this tile
        row_iota = lax.broadcasted_iota(jnp.int32, (chunk_rows, 1), 0)  # hoisted

    # Chunked accumulation: <=4 statically-unrolled chunks, each a whole number
    # of 8-row sublane groups -> bounded f32 temporaries, no cross-lane XLU.
    for ch in range(num_chunks):
        sl = pl.ds(ch * chunk_rows, chunk_rows)
        g = g_ref[sl, :].astype(jnp.float32)
        c = c_ref[sl, :].astype(jnp.float32)
        m = m_ref[sl, :].astype(jnp.float32)
        w = jnp.abs(g - c) * m                          # (chunk_rows, Wb) f32
        if needs_mask:
            valid = (row_iota + ch * chunk_rows) < limit
            # select (not multiply): OOB tail of a partial block may be NaN/Inf.
            w = jnp.where(valid, w, 0.0)
        acc_ref[...] += w.reshape(chunk_rows // _SUBLANE, _SUBLANE,
                                  w.shape[-1]).sum(axis=0)

    @pl.when(step == steps - 1)
    def _finalize():
        o_ref[...] = (acc_ref[...] * inv_count).astype(o_ref.dtype)


def temporal_loss(generated, corrupted, weight_mask):
    """Pallas implementation of TemporalLoss.forward.

    Args:
      generated, corrupted, weight_mask: arrays of shape (N, C, H, W).
    Returns:
      array of shape (W,) -- mean over dims (0, 1, 2) of |g - c| * mask.
    """
    assert generated.shape == corrupted.shape == weight_mask.shape
    N, C, H, W = generated.shape
    rows = N * C * H
    assert rows > 0 and W > 0
    out_dtype = generated.dtype

    cores, vmem_cap = _tpu_info()

    # ---- lane packing (k | rows  =>  reshape is metadata-only, no pad/copy) --
    k = _choose_pack_factor(rows, W)
    Wb = k * W
    Wb_lanes = _round_up(Wb, _LANE)        # what VMEM/vregs actually occupy
    super_rows = rows // k

    P = cores if (cores > 1 and super_rows >= cores * _SUBLANE) else 1

    itemsizes = [jnp.dtype(a.dtype).itemsize
                 for a in (generated, corrupted, weight_mask)]
    max_item = max(itemsizes)

    # ---- tile rows from the per-buffer budget, split into <=4 in-kernel chunks
    rows_tile = max(_SUBLANE,
                    (_PER_BUFFER_CAP // (Wb_lanes * max_item)) // _SUBLANE * _SUBLANE)
    rows_tile = min(rows_tile, _round_up(_ceil_div(super_rows, P), _SUBLANE))
    num_chunks = max(1, min(_MAX_INNER_CHUNKS, rows_tile // _SUBLANE))
    chunk_rows = _round_up(_ceil_div(rows_tile, num_chunks), _SUBLANE)
    rows_tile = chunk_rows * num_chunks

    steps = _ceil_div(super_rows, P * rows_tile)
    last_block = _ceil_div(super_rows, rows_tile) - 1
    needs_mask = (P * steps * rows_tile) != super_rows

    # ---- packed 2-D views: contiguous reshape, zero extra HBM traffic --------
    g2 = generated.reshape(super_rows, Wb)
    c2 = corrupted.reshape(super_rows, Wb)
    m2 = weight_mask.reshape(super_rows, Wb)

    # ---- VMEM limit sized to the real footprint (lane-rounded, incl. temps) --
    footprint = (2 * rows_tile * Wb_lanes * sum(itemsizes)   # double-buffered inputs
                 + 4 * chunk_rows * Wb_lanes * 4             # f32 elementwise temps
                 + 3 * _SUBLANE * Wb_lanes * 4)              # accumulator + out blocks
    vmem_limit = int(min(vmem_cap, max(2 * footprint, 32 << 20)))

    kernel = functools.partial(
        _temporal_loss_kernel,
        inv_count=1.0 / float(rows), super_rows=super_rows, steps=steps,
        rows_tile=rows_tile, chunk_rows=chunk_rows, num_chunks=num_chunks,
        last_block=last_block, needs_mask=needs_mask)

    # Clamp to the last in-bounds block: fully-OOB grid points (possible when
    # P > 1) re-read the last partial block instead of DMA-ing out of range;
    # the in-kernel mask zeroes their contribution.
    def in_map(p, i):
        return (jnp.minimum(p * steps + i, last_block), 0)

    def run(sem0):
        return pl.pallas_call(
            kernel,
            out_shape=jax.ShapeDtypeStruct((P * _SUBLANE, Wb), jnp.float32),
            grid_spec=pltpu.PrefetchScalarGridSpec(
                num_scalar_prefetch=0,
                grid=(P, steps),
                in_specs=[
                    pl.BlockSpec((rows_tile, Wb), in_map),
                    pl.BlockSpec((rows_tile, Wb), in_map),
                    pl.BlockSpec((rows_tile, Wb), in_map),
                ],
                out_specs=pl.BlockSpec((_SUBLANE, Wb), lambda p, i: (p, 0)),
                scratch_shapes=[pltpu.VMEM((_SUBLANE, Wb), jnp.float32)],
            ),
            compiler_params=pltpu.CompilerParams(
                dimension_semantics=(sem0, pltpu.ARBITRARY),
                vmem_limit_bytes=vmem_limit,
            ),
        )(g2, c2, m2)

    if P > 1:
        try:
            out = run(pltpu.CORE_PARALLEL)   # shard leading axis across TensorCores
        except Exception:
            out = run(pltpu.PARALLEL)        # safe fallback
    else:
        out = run(pltpu.ARBITRARY)

    # Collapse (P slabs) x (8 sublanes) x (k lane-packed rows) -> (W,)
    return out.reshape(P * _SUBLANE * k, W).sum(axis=0).astype(out_dtype)


def temporal_loss_ref(generated, corrupted, weight_mask):
    l1 = jnp.abs(generated - corrupted)
    lc = l1 * weight_mask
    return lc.mean(axis=(0, 1, 2))


if __name__ == "__main__":
    key = jax.random.PRNGKey(0)

    def make_inputs(shape, k):
        k1, k2, k3 = jax.random.split(k, 3)
        g = jax.random.normal(k1, shape, dtype=jnp.float32)
        c = jax.random.normal(k2, shape, dtype=jnp.float32)
        m = jax.random.uniform(k3, shape, dtype=jnp.float32)
        return g, c, m

    k_a, k_b = jax.random.split(key)

    # Primary shape (W=16 -> k=8, Wb=128; exact tiling, unmasked path).
    g, c, m = make_inputs((2, 4, 16, 16), k_a)
    out = jax.block_until_ready(temporal_loss(g, c, m))
    ref = temporal_loss_ref(g, c, m)
    assert out.shape == (16,), out.shape
    assert jnp.allclose(out, ref, atol=1e-5, rtol=1e-5), (out, ref)

    # Ragged row count (N*C*H = 60): exercises divisor packing (k=6, Wb=96)
    # and the in-kernel tail masking path (no host-side padding anywhere).
    g2, c2, m2 = make_inputs((2, 3, 10, 16), k_b)
    out2 = jax.block_until_ready(temporal_loss(g2, c2, m2))
    ref2 = temporal_loss_ref(g2, c2, m2)
    assert out2.shape == (16,), out2.shape
    assert jnp.allclose(out2, ref2, atol=1e-5, rtol=1e-5), (out2, ref2)

    print("KERNEL_OK")
</pallas_src>

<mosaic_0001>
module attributes {stable_mosaic.version = 11 : i64} {
  func.func @_temporal_loss_kernel(%arg0: i32, %arg1: i32, %arg2: memref<16x128xf32, #tpu.memory_space<vmem>>, %arg3: memref<16x128xf32, #tpu.memory_space<vmem>>, %arg4: memref<16x128xf32, #tpu.memory_space<vmem>>, %arg5: memref<8x128xf32, #tpu.memory_space<vmem>>, %arg6: memref<8x128xf32, #tpu.memory_space<vmem>>) attributes {dimension_semantics = [#tpu.dimension_semantics<arbitrary>, #tpu.dimension_semantics<arbitrary>], iteration_bounds = array<i64: 1, 1>, scalar_prefetch = 0 : i64, scratch_operands = 1 : i64, tpu.core_type = #tpu.core_type<tc>, window_params = [{transform_indices = @transform_0, window_bounds = array<i64: 16, 128>}, {transform_indices = @transform_1, window_bounds = array<i64: 16, 128>}, {transform_indices = @transform_2, window_bounds = array<i64: 16, 128>}, {transform_indices = @transform_3, window_bounds = array<i64: 8, 128>}]} {
    %c0_i32 = arith.constant 0 : i32
    %0 = arith.cmpi eq, %arg1, %c0_i32 : i32
    %1 = arith.extui %0 : i1 to i32
    %c0_i32_0 = arith.constant 0 : i32
    %2 = arith.cmpi ne, %1, %c0_i32_0 : i32
    scf.if %2 {
      %cst_22 = arith.constant 0.000000e+00 : f32
      %28 = vector.broadcast %cst_22 : f32 to vector<8x128xf32>
      %c0_23 = arith.constant 0 : index
      %c0_24 = arith.constant 0 : index
      %29 = vector.load %arg6[%c0_23, %c0_24] : memref<8x128xf32, #tpu.memory_space<vmem>>, vector<8x128xf32>
      tpu.vector_store %arg6[%c0_23, %c0_24], %28 {strides = array<i32>} : memref<8x128xf32, #tpu.memory_space<vmem>>, vector<8x128xf32>,
    } else {
    }
    %c0 = arith.constant 0 : index
    %c0_1 = arith.constant 0 : index
    %3 = vector.load %arg2[%c0, %c0_1] : memref<16x128xf32, #tpu.memory_space<vmem>>, vector<8x128xf32>
    %c0_2 = arith.constant 0 : index
    %c0_3 = arith.constant 0 : index
    %4 = vector.load %arg3[%c0_2, %c0_3] : memref<16x128xf32, #tpu.memory_space<vmem>>, vector<8x128xf32>
    %c0_4 = arith.constant 0 : index
    %c0_5 = arith.constant 0 : index
    %5 = vector.load %arg4[%c0_4, %c0_5] : memref<16x128xf32, #tpu.memory_space<vmem>>, vector<8x128xf32>
    %6 = arith.subf %3, %4 : vector<8x128xf32>
    %7 = math.absf %6 : vector<8x128xf32>
    %8 = arith.mulf %7, %5 : vector<8x128xf32>
    %c0_6 = arith.constant 0 : index
    %c0_7 = arith.constant 0 : index
    %9 = vector.load %arg6[%c0_6, %c0_7] : memref<8x128xf32, #tpu.memory_space<vmem>>, vector<8x128xf32>
    %10 = vector.shape_cast %8 : vector<8x128xf32> to vector<1x8x128xf32>
    %cst = arith.constant dense<0.000000e+00> : vector<8x128xf32>
    %11 = vector.multi_reduction <add>, %10, %cst [0] : vector<1x8x128xf32> to vector<8x128xf32>
    %12 = arith.addf %9, %11 : vector<8x128xf32>
    %c0_8 = arith.constant 0 : index
    %c0_9 = arith.constant 0 : index
    %13 = vector.load %arg6[%c0_8, %c0_9] : memref<8x128xf32, #tpu.memory_space<vmem>>, vector<8x128xf32>
    tpu.vector_store %arg6[%c0_8, %c0_9], %12 {strides = array<i32>} : memref<8x128xf32, #tpu.memory_space<vmem>>, vector<8x128xf32>,
    %c8 = arith.constant 8 : index
    %c0_10 = arith.constant 0 : index
    %14 = vector.load %arg2[%c8, %c0_10] : memref<16x128xf32, #tpu.memory_space<vmem>>, vector<8x128xf32>
    %c8_11 = arith.constant 8 : index
    %c0_12 = arith.constant 0 : index
    %15 = vector.load %arg3[%c8_11, %c0_12] : memref<16x128xf32, #tpu.memory_space<vmem>>, vector<8x128xf32>
    %c8_13 = arith.constant 8 : index
    %c0_14 = arith.constant 0 : index
    %16 = vector.load %arg4[%c8_13, %c0_14] : memref<16x128xf32, #tpu.memory_space<vmem>>, vector<8x128xf32>
    %17 = arith.subf %14, %15 : vector<8x128xf32>
    %18 = math.absf %17 : vector<8x128xf32>
    %19 = arith.mulf %18, %16 : vector<8x128xf32>
    %c0_15 = arith.constant 0 : index
    %c0_16 = arith.constant 0 : index
    %20 = vector.load %arg6[%c0_15, %c0_16] : memref<8x128xf32, #tpu.memory_space<vmem>>, vector<8x128xf32>
    %21 = vector.shape_cast %19 : vector<8x128xf32> to vector<1x8x128xf32>
    %cst_17 = arith.constant dense<0.000000e+00> : vector<8x128xf32>
    %22 = vector.multi_reduction <add>, %21, %cst_17 [0] : vector<1x8x128xf32> to vector<8x128xf32>
    %23 = arith.addf %20, %22 : vector<8x128xf32>
    %c0_18 = arith.constant 0 : index
    %c0_19 = arith.constant 0 : index
    %24 = vector.load %arg6[%c0_18, %c0_19] : memref<8x128xf32, #tpu.memory_space<vmem>>, vector<8x128xf32>
    tpu.vector_store %arg6[%c0_18, %c0_19], %23 {strides = array<i32>} : memref<8x128xf32, #tpu.memory_space<vmem>>, vector<8x128xf32>,
    %c0_i32_20 = arith.constant 0 : i32
    %25 = arith.cmpi eq, %arg1, %c0_i32_20 : i32
    %26 = arith.extui %25 : i1 to i32
    %c0_i32_21 = arith.constant 0 : i32
    %27 = arith.cmpi ne, %26, %c0_i32_21 : i32
    scf.if %27 {
      %c0_22 = arith.constant 0 : index
      %c0_23 = arith.constant 0 : index
      %28 = vector.load %arg6[%c0_22, %c0_23] : memref<8x128xf32, #tpu.memory_space<vmem>>, vector<8x128xf32>
      %cst_24 = arith.constant 7.812500e-03 : f32
      %29 = vector.broadcast %cst_24 : f32 to vector<8x128xf32>
      %30 = arith.mulf %28, %29 : vector<8x128xf32>
      %c0_25 = arith.constant 0 : index
      %c0_26 = arith.constant 0 : index
      %31 = vector.load %arg5[%c0_25, %c0_26] : memref<8x128xf32, #tpu.memory_space<vmem>>, vector<8x128xf32>
      tpu.vector_store %arg5[%c0_25, %c0_26], %30 {strides = array<i32>} : memref<8x128xf32, #tpu.memory_space<vmem>>, vector<8x128xf32>,
    } else {
    }
    return
  }
  func.func @transform_0(%arg0: i32, %arg1: i32) -> (i32, i32) {
    %c1_i32 = arith.constant 1 : i32
    %0 = arith.muli %arg0, %c1_i32 : i32
    %1 = arith.addi %0, %arg1 : i32
    %c0_i32 = arith.constant 0 : i32
    %2 = arith.minsi %1, %c0_i32 : i32
    %c0_i32_0 = arith.constant 0 : i32
    %c0_i32_1 = arith.constant 0 : i32
    return %2, %c0_i32_0 : i32, i32
  }
  func.func @transform_1(%arg0: i32, %arg1: i32) -> (i32, i32) {
    %c1_i32 = arith.constant 1 : i32
    %0 = arith.muli %arg0, %c1_i32 : i32
    %1 = arith.addi %0, %arg1 : i32
    %c0_i32 = arith.constant 0 : i32
    %2 = arith.minsi %1, %c0_i32 : i32
    %c0_i32_0 = arith.constant 0 : i32
    %c0_i32_1 = arith.constant 0 : i32
    return %2, %c0_i32_0 : i32, i32
  }
  func.func @transform_2(%arg0: i32, %arg1: i32) -> (i32, i32) {
    %c1_i32 = arith.constant 1 : i32
    %0 = arith.muli %arg0, %c1_i32 : i32
    %1 = arith.addi %0, %arg1 : i32
    %c0_i32 = arith.constant 0 : i32
    %2 = arith.minsi %1, %c0_i32 : i32
    %c0_i32_0 = arith.constant 0 : i32
    %c0_i32_1 = arith.constant 0 : i32
    return %2, %c0_i32_0 : i32, i32
  }
  func.func @transform_3(%arg0: i32, %arg1: i32) -> (i32, i32) {
    %c0_i32 = arith.constant 0 : i32
    %c0_i32_0 = arith.constant 0 : i32
    return %arg0, %c0_i32 : i32, i32
  }
}

</mosaic_0001>

<llo_original>
// kernel: tpu_custom_call.1
$region0: #{tpu_custom_call.1}
  #allocation0 [shape = 'u32[]', space=smem, size = 0x4, offset = 0x4, fixed_abs, tag = 'smem constant byte address 0x4 - core index']
  #allocation1 [shape = 'u32[144,128]{1,0:T(1,128)}', space=vmem, size = 0x12000, scoped, tag = 'internal scratch']
  #allocation2 [shape = 'f32[8,128]{1,0:T(8,128)}', space=vmem, size = 0x1000, scoped, tag = 'scratch operand']
  %s0 = inlined_call_operand.hbm [shape: f32[16,128], index: 0, kind: input, shape index: {}]
  %s1 = inlined_call_operand.hbm [shape: f32[16,128], index: 1, kind: input, shape index: {}]
  %s2 = inlined_call_operand.hbm [shape: f32[16,128], index: 2, kind: input, shape index: {}]
  %s3 = inlined_call_operand.hbm [shape: f32[8,128], index: 3, kind: output, shape index: {}]
  %s4 = sld [smem:[#allocation0]]
  $region42: #{tpu_custom_call.1} parent=0
    _
  %s6 = ssub.s32 1, %s4
  %s7 = scalar_select 0, %s6, %s4
  $region1: #{tpu_custom_call.1} parent=0
    #allocation3 [shape = 'u8[8192]{0}', space=vmem, size = 0x2000, scoped, tag = 'input window, operand 0, single buffered']
    #allocation4 [shape = 's32[1]{0}', space=sflag, size = 0x4, scoped, tag = 'scoped memory for tpu_custom_call.1']
    #allocation5 [shape = 's32[1]{0}', space=sflag, size = 0x4, scoped, tag = 'scoped memory for tpu_custom_call.1']
    #allocation6 [shape = 'u8[8192]{0}', space=vmem, size = 0x2000, scoped, tag = 'input window, operand 1, single buffered']
    #allocation7 [shape = 's32[1]{0}', space=sflag, size = 0x4, scoped, tag = 'scoped memory for tpu_custom_call.1']
    #allocation8 [shape = 'u8[8192]{0}', space=vmem, size = 0x2000, scoped, tag = 'input window, operand 2, single buffered']
    #allocation9 [shape = 'u8[4096]{0}', space=vmem, size = 0x1000, scoped, tag = 'output window, operand 0, single buffered']
    %8 = vsyncpa [#allocation4], 0
    %9 = vsyncpa [#allocation7], 0
    %10 = vsyncpa [#allocation5], 0
    // Predicated region
    $region2: #{tpu_custom_call.1} parent=1 // pred_check
      _
    $region3: #{tpu_custom_call.1} parent=1 // pred_check_branch
      %12 = sbr.rel (0) target = $region5
    $region4: #{tpu_custom_call.1} parent=1 // pred_region
      %s13 = sadd.s32 0, 0
      %p14 = scmp.lt.s32.totalorder %s13, 0
      %s15 = scalar_select %p14, %s13, 0
      %s16 = smul.u32 2, %s15
      %s18 = ssub.s32 256, 256
      %19 = vsyncadd [#allocation4], %s18
      %s20 = smul.addr %s16, 128
      %s21 = scalar_lea.hbm %s0, %s20
      %s22 = sshll.u32 [#allocation3], 4
      %s23 = int_to_ptr.vmem [resolvable:$true] %s22
      %28 = dma.hbm_to_vmem [thread:$0]  %s21, 256, %s23, [#allocation4], 128, 128, 8
    $region5: #{tpu_custom_call.1} parent=1 // pred_fallthru
      _
    // Predicated region
    $region6: #{tpu_custom_call.1} parent=1 // pred_check
      _
    $region7: #{tpu_custom_call.1} parent=1 // pred_check_branch
      %30 = sbr.rel (0) target = $region9
    $region8: #{tpu_custom_call.1} parent=1 // pred_region
      %s31 = sadd.s32 0, 0
      %p32 = scmp.lt.s32.totalorder %s31, 0
      %s33 = scalar_select %p32, %s31, 0
      %s34 = smul.u32 2, %s33
      %s36 = ssub.s32 256, 256
      %37 = vsyncadd [#allocation7], %s36
      %s38 = smul.addr %s34, 128
      %s39 = scalar_lea.hbm %s1, %s38
      %s40 = sshll.u32 [#allocation6], 4
      %s41 = int_to_ptr.vmem [resolvable:$true] %s40
      %46 = dma.hbm_to_vmem [thread:$0]  %s39, 256, %s41, [#allocation7], 128, 128, 8
    $region9: #{tpu_custom_call.1} parent=1 // pred_fallthru
      _
    // Predicated region
    $region10: #{tpu_custom_call.1} parent=1 // pred_check
      _
    $region11: #{tpu_custom_call.1} parent=1 // pred_check_branch
      %48 = sbr.rel (0) target = $region13
    $region12: #{tpu_custom_call.1} parent=1 // pred_region
      %s49 = sadd.s32 0, 0
      %p50 = scmp.lt.s32.totalorder %s49, 0
      %s51 = scalar_select %p50, %s49, 0
      %s52 = smul.u32 2, %s51
      %s54 = ssub.s32 256, 256
      %55 = vsyncadd [#allocation7], %s54
      %s56 = smul.addr %s52, 128
      %s57 = scalar_lea.hbm %s2, %s56
      %s58 = sshll.u32 [#allocation8], 4
      %s59 = int_to_ptr.vmem [resolvable:$true] %s58
      %64 = dma.hbm_to_vmem [thread:$0]  %s57, 256, %s59, [#allocation7], 128, 128, 8
    $region13: #{tpu_custom_call.1} parent=1 // pred_fallthru
      _
    // Predicated region
    $region14: #{tpu_custom_call.1} parent=1 // pred_check
      _
    $region15: #{tpu_custom_call.1} parent=1 // pred_check_branch
      %66 = sbr.rel (0) target = $region17
    $region16: #{tpu_custom_call.1} parent=1 // pred_region
      %67 = dma.done [#allocation4], 256
    $region17: #{tpu_custom_call.1} parent=1 // pred_fallthru
      _
    // Predicated region
    $region18: #{tpu_custom_call.1} parent=1 // pred_check
      _
    $region19: #{tpu_custom_call.1} parent=1 // pred_check_branch
      %69 = sbr.rel (0) target = $region21
    $region20: #{tpu_custom_call.1} parent=1 // pred_region
      %70 = dma.done [#allocation7], 256
    $region21: #{tpu_custom_call.1} parent=1 // pred_fallthru
      _
    // Predicated region
    $region22: #{tpu_custom_call.1} parent=1 // pred_check
      _
    $region23: #{tpu_custom_call.1} parent=1 // pred_check_branch
      %72 = sbr.rel (0) target = $region25
    $region24: #{tpu_custom_call.1} parent=1 // pred_region
      %73 = dma.done [#allocation7], 256
    $region25: #{tpu_custom_call.1} parent=1 // pred_fallthru
      _
    %s74 = sadd.s32 0, 0
    %p75 = scmp.lt.s32.totalorder %s74, 0
    %s76 = scalar_select %p75, %s74, 0
    %s77 = smul.u32 2, %s76
    %s78 = sadd.s32 0, 0
    %p79 = scmp.lt.s32.totalorder %s78, 0
    %s80 = scalar_select %p79, %s78, 0
    %s81 = smul.u32 2, %s80
    %s82 = sadd.s32 0, 0
    %p83 = scmp.lt.s32.totalorder %s82, 0
    %s84 = scalar_select %p83, %s82, 0
    %s85 = smul.u32 2, %s84
    %p86 = scmp.eq.s32.totalorder 0, 0
    // Predicated region
    $region26: #{tpu_custom_call.1} parent=1 // pred_check
      %p87 = pneg %p86
    $region27: #{tpu_custom_call.1} parent=1 // pred_check_branch
      %89 = sbr.rel (%p87) target = $region29
    $region28: #{tpu_custom_call.1} parent=1 // pred_region
      %90 = vst [vmem:[#allocation2] sm:$0xff] 0.0
    $region29: #{tpu_custom_call.1} parent=1 // pred_fallthru
      _
    %v91 = vld [vmem:[#allocation3] sm:$0xff]
    %v92 = vld [vmem:[#allocation6] sm:$0xff]
    %v93 = vld [vmem:[#allocation8] sm:$0xff]
    %v94 = vsub.f32 %v91, %v92
    %v95 = vand.u32 2147483647, %v94
    %v96 = vmul.f32 %v95, %v93
    %v97 = vld [vmem:[#allocation2] sm:$0xff]
    %v98 = vadd.f32 %v96, 0.0
    %v99 = vadd.f32 %v97, %v98
    %100 = vst [vmem:[#allocation2] sm:$0xff] %v99
    %v101 = vld [vmem:[#allocation3 + $0x8] sm:$0xff]
    %v102 = vld [vmem:[#allocation6 + $0x8] sm:$0xff]
    %v103 = vld [vmem:[#allocation8 + $0x8] sm:$0xff]
    %v104 = vsub.f32 %v101, %v102
    %v105 = vand.u32 2147483647, %v104
    %v106 = vmul.f32 %v105, %v103
    %v107 = vld [vmem:[#allocation2] sm:$0xff]
    %v108 = vadd.f32 %v106, 0.0
    %v109 = vadd.f32 %v107, %v108
    %110 = vst [vmem:[#allocation2] sm:$0xff] %v109
    // Predicated region
    $region30: #{tpu_custom_call.1} parent=1 // pred_check
      %p111 = pneg %p86
    $region31: #{tpu_custom_call.1} parent=1 // pred_check_branch
      %113 = sbr.rel (%p111) target = $region33
    $region32: #{tpu_custom_call.1} parent=1 // pred_region
      %v114 = vld [vmem:[#allocation2] sm:$0xff]
      %v115 = vmul.f32 %v114, 0.0078125
      %116 = vst [vmem:[#allocation9] sm:$0xff] %v115
    $region33: #{tpu_custom_call.1} parent=1 // pred_fallthru
      _
    // Predicated region
    $region34: #{tpu_custom_call.1} parent=1 // pred_check
      _
    $region35: #{tpu_custom_call.1} parent=1 // pred_check_branch
      %118 = sbr.rel (0) target = $region37
    $region36: #{tpu_custom_call.1} parent=1 // pred_region
      %s120 = ssub.s32 128, 128
      %121 = vsyncadd [#allocation5], %s120
      %s123 = sshll.u32 [#allocation9], 4
      %s124 = int_to_ptr.vmem [resolvable:$true] %s123
      %126 = dma.vmem_to_hbm [thread:$0]  %s124, 128, %s3, [#allocation5]
    $region37: #{tpu_custom_call.1} parent=1 // pred_fallthru
      _
    // Predicated region
    $region38: #{tpu_custom_call.1} parent=1 // pred_check
      _
    $region39: #{tpu_custom_call.1} parent=1 // pred_check_branch
      %128 = sbr.rel (0) target = $region41
    $region40: #{tpu_custom_call.1} parent=1 // pred_region
      %129 = dma.done [#allocation5], 128
    $region41: #{tpu_custom_call.1} parent=1 // pred_fallthru
      _
    %130 = vsyncpa [#allocation4], 1
    %131 = vsyncpa [#allocation7], 1
    %132 = vsyncpa [#allocation5], 1

</llo_original>
